<compile_context>
chip_gen: v6e
topology: v6e:2x2x1
jax: 0.10.0
libtpu: 0.0.40
codegen_flags: <defaults>
</compile_context>

<pallas_src>
import functools

import jax
import jax.numpy as jnp
from jax import lax
from jax.experimental import pallas as pl
from jax.experimental.pallas import tpu as pltpu

IN_FEATURES = 4
H1 = 8
H2 = 9
OUT_FEATURES = 3

LANE = 128           # lane width; batch tiles are multiples of this
CHUNK = 1024         # lanes per in-kernel compute chunk (temps ~<=64 KiB each)
TB_MAX = 64 * 1024   # max batch tile: ~8.5 MiB VMEM incl. double buffering
MIN_GRID = 2         # keep >=2 grid steps when possible (v7x has 2 TensorCores)


def _make_kernel(chunk):
    def mlp_kernel(x_ref, w1_ref, b1_ref, w2_ref, b2_ref, w3_ref, b3_ref,
                   o_ref):
        """x_ref: (IN, tb), o_ref: (OUT, tb); w*: (out, in), b*: (out, 1)."""
        # Weights/biases are tiny and VMEM-resident; load them once per step.
        w1, b1 = w1_ref[...], b1_ref[...]
        w2, b2 = w2_ref[...], b2_ref[...]
        w3, b3 = w3_ref[...], b3_ref[...]
        n_chunks = x_ref.shape[-1] // chunk

        def dense(w, b, a, relu):
            # y^T = W @ a   with a: (K, chunk), W: (N, K) [PyTorch layout].
            n, k = w.shape
            # Bias folded into the accumulator init (single lane-broadcast).
            acc = jnp.broadcast_to(b, (n, a.shape[-1]))
            # K <= 9: unrolled VPU broadcast-FMAs -- no >93%-padded MXU tile.
            for kk in range(k):
                acc = acc + w[:, kk:kk + 1] * a[kk:kk + 1, :]
            return jnp.maximum(acc, 0.0) if relu else acc

        def body(c, carry):
            sl = pl.ds(pl.multiple_of(c * chunk, chunk), chunk)
            x = x_ref[:, sl]                         # (IN, chunk)
            h1 = dense(w1, b1, x, True)              # (H1, chunk)
            h2 = dense(w2, b2, h1, True)             # (H2, chunk)
            o_ref[:, sl] = dense(w3, b3, h2, False).astype(o_ref.dtype)
            return carry

        lax.fori_loop(0, n_chunks, body, 0)

    return mlp_kernel


def _round_up(x, m):
    return pl.cdiv(x, m) * m


def _pick_tb(B):
    """Batch tile: large blocks, >=MIN_GRID steps, <1 quantum of padding."""
    quantum = CHUNK if B >= CHUNK else LANE
    tiles = pl.cdiv(B, quantum)
    steps = min(max(pl.cdiv(tiles, TB_MAX // quantum), MIN_GRID), tiles)
    return pl.cdiv(tiles, steps) * quantum


def _mlp_pallas(xt, w1, b1, w2, b2, w3, b3, tb):
    """xt: (IN_FEATURES, Bp) lane-dense, Bp % tb == 0 -> (OUT_FEATURES, Bp)."""
    Bp = xt.shape[1]
    grid = (Bp // tb,)
    chunk = CHUNK if tb % CHUNK == 0 else LANE

    def resident(shape):
        # Full-extent block, same block index every step -> stays VMEM-resident.
        return pl.BlockSpec(shape, lambda i: (0,) * len(shape))

    n_weight_elems = (IN_FEATURES * H1 + H1 + H1 * H2 + H2
                      + H2 * OUT_FEATURES + OUT_FEATURES)
    cost = pl.CostEstimate(
        flops=2 * Bp * (IN_FEATURES * H1 + H1 * H2 + H2 * OUT_FEATURES),
        transcendentals=0,
        bytes_accessed=4 * (Bp * (IN_FEATURES + OUT_FEATURES) + n_weight_elems),
    )

    return pl.pallas_call(
        _make_kernel(chunk),
        out_shape=jax.ShapeDtypeStruct((OUT_FEATURES, Bp), jnp.float32),
        grid=grid,
        in_specs=[
            pl.BlockSpec((IN_FEATURES, tb), lambda i: (0, i)),
            resident(w1.shape), resident(b1.shape),
            resident(w2.shape), resident(b2.shape),
            resident(w3.shape), resident(b3.shape),
        ],
        out_specs=pl.BlockSpec((OUT_FEATURES, tb), lambda i: (0, i)),
        compiler_params=pltpu.CompilerParams(
            dimension_semantics=("parallel",),
            vmem_limit_bytes=32 * 1024 * 1024,
        ),
        cost_estimate=cost,
    )(xt, w1, b1, w2, b2, w3, b3)


@functools.partial(jax.jit, static_argnames=("tb",))
def mlp_forward_t(xt, w1, b1, w2, b2, w3, b3, *, tb=None):
    """Lane-dense entry point: xt (IN_FEATURES, B) -> (OUT_FEATURES, B).

    Preferred for large B: no wrapper-side transposes, so end-to-end HBM
    traffic is just the 16 B/elem read + 12 B/elem write the kernel does.
    """
    B = xt.shape[1]
    tb = _pick_tb(B) if tb is None else _round_up(max(int(tb), LANE), LANE)
    Bp = _round_up(B, tb)
    if Bp != B:
        xt = jnp.pad(xt, ((0, 0), (0, Bp - B)))
    out_t = _mlp_pallas(xt, w1, b1, w2, b2, w3, b3, tb)
    return out_t[:, :B] if Bp != B else out_t


@functools.partial(jax.jit, static_argnames=("tb",))
def mlp_forward(x, w1, b1, w2, b2, w3, b3, *, tb=None):
    """PyTorch-contract entry point: x (B, IN_FEATURES) -> (B, OUT_FEATURES).

    The x.T / out.T here are wrapper-side layout traffic; callers that can
    hold activations as (features, batch) should use mlp_forward_t directly.
    """
    return mlp_forward_t(x.T, w1, b1, w2, b2, w3, b3, tb=tb).T


def init_params(key):
    """Mimics nn.Linear's uniform(-1/sqrt(fan_in), 1/sqrt(fan_in)) init.

    Weights stored as (out, in) (PyTorch layout), biases as (out, 1).
    """
    params = []
    dims = [(IN_FEATURES, H1), (H1, H2), (H2, OUT_FEATURES)]
    for fan_in, fan_out in dims:
        key, kw, kb = jax.random.split(key, 3)
        bound = 1.0 / (fan_in ** 0.5)
        w = jax.random.uniform(kw, (fan_out, fan_in), jnp.float32, -bound, bound)
        b = jax.random.uniform(kb, (fan_out, 1), jnp.float32, -bound, bound)
        params += [w, b]
    return params


def reference_forward(x, w1, b1, w2, b2, w3, b3):
    h1 = jnp.maximum(x @ w1.T + b1.T, 0.0)
    h2 = jnp.maximum(h1 @ w2.T + b2.T, 0.0)
    return h2 @ w3.T + b3.T


if __name__ == "__main__":
    key = jax.random.PRNGKey(0)
    key, kx = jax.random.split(key)

    B = 300  # exercises a 2-step batch grid, in-kernel chunk loop, and padding
    x = jax.random.normal(kx, (B, IN_FEATURES), jnp.float32)
    w1, b1, w2, b2, w3, b3 = init_params(key)

    ref = reference_forward(x, w1, b1, w2, b2, w3, b3)

    # PyTorch-contract path: (B, IN) -> (B, OUT).
    out = jax.block_until_ready(mlp_forward(x, w1, b1, w2, b2, w3, b3))
    assert out.shape == (B, OUT_FEATURES)
    assert jnp.allclose(out, ref, atol=1e-5, rtol=1e-5), "mismatch vs reference"

    # Lane-dense path (no wrapper transposes): (IN, B) -> (OUT, B).
    out_t = jax.block_until_ready(mlp_forward_t(x.T, w1, b1, w2, b2, w3, b3))
    assert out_t.shape == (OUT_FEATURES, B)
    assert jnp.allclose(out_t.T, ref, atol=1e-5, rtol=1e-5), "mismatch (lane-dense)"

    print("KERNEL_OK")
</pallas_src>

<mosaic_0001>
module attributes {stable_mosaic.version = 11 : i64} {
  func.func @mlp_kernel(%arg0: i32, %arg1: memref<4x256xf32, #tpu.memory_space<vmem>>, %arg2: memref<8x4xf32, #tpu.memory_space<vmem>>, %arg3: memref<8x1xf32, #tpu.memory_space<vmem>>, %arg4: memref<9x8xf32, #tpu.memory_space<vmem>>, %arg5: memref<9x1xf32, #tpu.memory_space<vmem>>, %arg6: memref<3x9xf32, #tpu.memory_space<vmem>>, %arg7: memref<3x1xf32, #tpu.memory_space<vmem>>, %arg8: memref<3x256xf32, #tpu.memory_space<vmem>>) attributes {dimension_semantics = [#tpu.dimension_semantics<parallel>], iteration_bounds = array<i64: 2>, scalar_prefetch = 0 : i64, scratch_operands = 0 : i64, tpu.core_type = #tpu.core_type<tc>, window_params = [{transform_indices = @transform_0, window_bounds = array<i64: 4, 256>}, {pipeline_mode = #tpu.pipeline_mode<synchronous>, transform_indices = @transform_1, window_bounds = array<i64: 8, 4>}, {pipeline_mode = #tpu.pipeline_mode<synchronous>, transform_indices = @transform_2, window_bounds = array<i64: 8, 1>}, {pipeline_mode = #tpu.pipeline_mode<synchronous>, transform_indices = @transform_3, window_bounds = array<i64: 9, 8>}, {pipeline_mode = #tpu.pipeline_mode<synchronous>, transform_indices = @transform_4, window_bounds = array<i64: 9, 1>}, {pipeline_mode = #tpu.pipeline_mode<synchronous>, transform_indices = @transform_5, window_bounds = array<i64: 3, 9>}, {pipeline_mode = #tpu.pipeline_mode<synchronous>, transform_indices = @transform_6, window_bounds = array<i64: 3, 1>}, {transform_indices = @transform_7, window_bounds = array<i64: 3, 256>}]} {
    %c0 = arith.constant 0 : index
    %c0_0 = arith.constant 0 : index
    %0 = vector.load %arg2[%c0, %c0_0] : memref<8x4xf32, #tpu.memory_space<vmem>>, vector<8x4xf32>
    %c0_1 = arith.constant 0 : index
    %c0_2 = arith.constant 0 : index
    %1 = vector.load %arg3[%c0_1, %c0_2] : memref<8x1xf32, #tpu.memory_space<vmem>>, vector<8x1xf32>
    %c0_3 = arith.constant 0 : index
    %c0_4 = arith.constant 0 : index
    %2 = vector.load %arg4[%c0_3, %c0_4] : memref<9x8xf32, #tpu.memory_space<vmem>>, vector<9x8xf32>
    %c0_5 = arith.constant 0 : index
    %c0_6 = arith.constant 0 : index
    %3 = vector.load %arg5[%c0_5, %c0_6] : memref<9x1xf32, #tpu.memory_space<vmem>>, vector<9x1xf32>
    %c0_7 = arith.constant 0 : index
    %c0_8 = arith.constant 0 : index
    %4 = vector.load %arg6[%c0_7, %c0_8] : memref<3x9xf32, #tpu.memory_space<vmem>>, vector<3x9xf32>
    %c0_9 = arith.constant 0 : index
    %c0_10 = arith.constant 0 : index
    %5 = vector.load %arg7[%c0_9, %c0_10] : memref<3x1xf32, #tpu.memory_space<vmem>>, vector<3x1xf32>
    %c0_i32 = arith.constant 0 : i32
    %c2_i32 = arith.constant 2 : i32
    %6 = arith.addi %c0_i32, %c2_i32 : i32
    %c1_i32 = arith.constant 1 : i32
    scf.for %arg9 = %c0_i32 to %6 step %c1_i32  : i32 {
      %c128_i32 = arith.constant 128 : i32
      %7 = arith.muli %arg9, %c128_i32 : i32
      %8 = tpu.assume_multiple %7, 128 : i32
      %c0_12 = arith.constant 0 : index
      %9 = arith.index_cast %8 : i32 to index
      %10 = vector.load %arg1[%c0_12, %9] : memref<4x256xf32, #tpu.memory_space<vmem>>, vector<4x128xf32>
      %11 = vector.shape_cast %1 : vector<8x1xf32> to vector<8x1xf32>
      %12 = vector.broadcast %11 : vector<8x1xf32> to vector<8x128xf32>
      %13 = vector.extract_strided_slice %0 {offsets = [0, 0], sizes = [8, 1], strides = [1, 1]} : vector<8x4xf32> to vector<8x1xf32>
      %14 = vector.extract_strided_slice %10 {offsets = [0, 0], sizes = [1, 128], strides = [1, 1]} : vector<4x128xf32> to vector<1x128xf32>
      %15 = vector.broadcast %13 : vector<8x1xf32> to vector<8x128xf32>
      %16 = vector.broadcast %14 : vector<1x128xf32> to vector<8x128xf32>
      %17 = arith.mulf %15, %16 : vector<8x128xf32>
      %18 = arith.addf %12, %17 : vector<8x128xf32>
      %19 = vector.extract_strided_slice %0 {offsets = [0, 1], sizes = [8, 1], strides = [1, 1]} : vector<8x4xf32> to vector<8x1xf32>
      %20 = vector.extract_strided_slice %10 {offsets = [1, 0], sizes = [1, 128], strides = [1, 1]} : vector<4x128xf32> to vector<1x128xf32>
      %21 = vector.broadcast %19 : vector<8x1xf32> to vector<8x128xf32>
      %22 = vector.broadcast %20 : vector<1x128xf32> to vector<8x128xf32>
      %23 = arith.mulf %21, %22 : vector<8x128xf32>
      %24 = arith.addf %18, %23 : vector<8x128xf32>
      %25 = vector.extract_strided_slice %0 {offsets = [0, 2], sizes = [8, 1], strides = [1, 1]} : vector<8x4xf32> to vector<8x1xf32>
      %26 = vector.extract_strided_slice %10 {offsets = [2, 0], sizes = [1, 128], strides = [1, 1]} : vector<4x128xf32> to vector<1x128xf32>
      %27 = vector.broadcast %25 : vector<8x1xf32> to vector<8x128xf32>
      %28 = vector.broadcast %26 : vector<1x128xf32> to vector<8x128xf32>
      %29 = arith.mulf %27, %28 : vector<8x128xf32>
      %30 = arith.addf %24, %29 : vector<8x128xf32>
      %31 = vector.extract_strided_slice %0 {offsets = [0, 3], sizes = [8, 1], strides = [1, 1]} : vector<8x4xf32> to vector<8x1xf32>
      %32 = vector.extract_strided_slice %10 {offsets = [3, 0], sizes = [1, 128], strides = [1, 1]} : vector<4x128xf32> to vector<1x128xf32>
      %33 = vector.broadcast %31 : vector<8x1xf32> to vector<8x128xf32>
      %34 = vector.broadcast %32 : vector<1x128xf32> to vector<8x128xf32>
      %35 = arith.mulf %33, %34 : vector<8x128xf32>
      %36 = arith.addf %30, %35 : vector<8x128xf32>
      %cst = arith.constant 0.000000e+00 : f32
      %37 = vector.broadcast %cst : f32 to vector<8x128xf32>
      %38 = arith.maximumf %36, %37 : vector<8x128xf32>
      %39 = vector.shape_cast %3 : vector<9x1xf32> to vector<9x1xf32>
      %40 = vector.broadcast %39 : vector<9x1xf32> to vector<9x128xf32>
      %41 = vector.extract_strided_slice %2 {offsets = [0, 0], sizes = [9, 1], strides = [1, 1]} : vector<9x8xf32> to vector<9x1xf32>
      %42 = vector.extract_strided_slice %38 {offsets = [0, 0], sizes = [1, 128], strides = [1, 1]} : vector<8x128xf32> to vector<1x128xf32>
      %43 = vector.broadcast %41 : vector<9x1xf32> to vector<9x128xf32>
      %44 = vector.broadcast %42 : vector<1x128xf32> to vector<9x128xf32>
      %45 = arith.mulf %43, %44 : vector<9x128xf32>
      %46 = arith.addf %40, %45 : vector<9x128xf32>
      %47 = vector.extract_strided_slice %2 {offsets = [0, 1], sizes = [9, 1], strides = [1, 1]} : vector<9x8xf32> to vector<9x1xf32>
      %48 = vector.extract_strided_slice %38 {offsets = [1, 0], sizes = [1, 128], strides = [1, 1]} : vector<8x128xf32> to vector<1x128xf32>
      %49 = vector.broadcast %47 : vector<9x1xf32> to vector<9x128xf32>
      %50 = vector.broadcast %48 : vector<1x128xf32> to vector<9x128xf32>
      %51 = arith.mulf %49, %50 : vector<9x128xf32>
      %52 = arith.addf %46, %51 : vector<9x128xf32>
      %53 = vector.extract_strided_slice %2 {offsets = [0, 2], sizes = [9, 1], strides = [1, 1]} : vector<9x8xf32> to vector<9x1xf32>
      %54 = vector.extract_strided_slice %38 {offsets = [2, 0], sizes = [1, 128], strides = [1, 1]} : vector<8x128xf32> to vector<1x128xf32>
      %55 = vector.broadcast %53 : vector<9x1xf32> to vector<9x128xf32>
      %56 = vector.broadcast %54 : vector<1x128xf32> to vector<9x128xf32>
      %57 = arith.mulf %55, %56 : vector<9x128xf32>
      %58 = arith.addf %52, %57 : vector<9x128xf32>
      %59 = vector.extract_strided_slice %2 {offsets = [0, 3], sizes = [9, 1], strides = [1, 1]} : vector<9x8xf32> to vector<9x1xf32>
      %60 = vector.extract_strided_slice %38 {offsets = [3, 0], sizes = [1, 128], strides = [1, 1]} : vector<8x128xf32> to vector<1x128xf32>
      %61 = vector.broadcast %59 : vector<9x1xf32> to vector<9x128xf32>
      %62 = vector.broadcast %60 : vector<1x128xf32> to vector<9x128xf32>
      %63 = arith.mulf %61, %62 : vector<9x128xf32>
      %64 = arith.addf %58, %63 : vector<9x128xf32>
      %65 = vector.extract_strided_slice %2 {offsets = [0, 4], sizes = [9, 1], strides = [1, 1]} : vector<9x8xf32> to vector<9x1xf32>
      %66 = vector.extract_strided_slice %38 {offsets = [4, 0], sizes = [1, 128], strides = [1, 1]} : vector<8x128xf32> to vector<1x128xf32>
      %67 = vector.broadcast %65 : vector<9x1xf32> to vector<9x128xf32>
      %68 = vector.broadcast %66 : vector<1x128xf32> to vector<9x128xf32>
      %69 = arith.mulf %67, %68 : vector<9x128xf32>
      %70 = arith.addf %64, %69 : vector<9x128xf32>
      %71 = vector.extract_strided_slice %2 {offsets = [0, 5], sizes = [9, 1], strides = [1, 1]} : vector<9x8xf32> to vector<9x1xf32>
      %72 = vector.extract_strided_slice %38 {offsets = [5, 0], sizes = [1, 128], strides = [1, 1]} : vector<8x128xf32> to vector<1x128xf32>
      %73 = vector.broadcast %71 : vector<9x1xf32> to vector<9x128xf32>
      %74 = vector.broadcast %72 : vector<1x128xf32> to vector<9x128xf32>
      %75 = arith.mulf %73, %74 : vector<9x128xf32>
      %76 = arith.addf %70, %75 : vector<9x128xf32>
      %77 = vector.extract_strided_slice %2 {offsets = [0, 6], sizes = [9, 1], strides = [1, 1]} : vector<9x8xf32> to vector<9x1xf32>
      %78 = vector.extract_strided_slice %38 {offsets = [6, 0], sizes = [1, 128], strides = [1, 1]} : vector<8x128xf32> to vector<1x128xf32>
      %79 = vector.broadcast %77 : vector<9x1xf32> to vector<9x128xf32>
      %80 = vector.broadcast %78 : vector<1x128xf32> to vector<9x128xf32>
      %81 = arith.mulf %79, %80 : vector<9x128xf32>
      %82 = arith.addf %76, %81 : vector<9x128xf32>
      %83 = vector.extract_strided_slice %2 {offsets = [0, 7], sizes = [9, 1], strides = [1, 1]} : vector<9x8xf32> to vector<9x1xf32>
      %84 = vector.extract_strided_slice %38 {offsets = [7, 0], sizes = [1, 128], strides = [1, 1]} : vector<8x128xf32> to vector<1x128xf32>
      %85 = vector.broadcast %83 : vector<9x1xf32> to vector<9x128xf32>
      %86 = vector.broadcast %84 : vector<1x128xf32> to vector<9x128xf32>
      %87 = arith.mulf %85, %86 : vector<9x128xf32>
      %88 = arith.addf %82, %87 : vector<9x128xf32>
      %cst_13 = arith.constant 0.000000e+00 : f32
      %89 = vector.broadcast %cst_13 : f32 to vector<9x128xf32>
      %90 = arith.maximumf %88, %89 : vector<9x128xf32>
      %91 = vector.shape_cast %5 : vector<3x1xf32> to vector<3x1xf32>
      %92 = vector.broadcast %91 : vector<3x1xf32> to vector<3x128xf32>
      %93 = vector.extract_strided_slice %4 {offsets = [0, 0], sizes = [3, 1], strides = [1, 1]} : vector<3x9xf32> to vector<3x1xf32>
      %94 = vector.extract_strided_slice %90 {offsets = [0, 0], sizes = [1, 128], strides = [1, 1]} : vector<9x128xf32> to vector<1x128xf32>
      %95 = vector.broadcast %93 : vector<3x1xf32> to vector<3x128xf32>
      %96 = vector.broadcast %94 : vector<1x128xf32> to vector<3x128xf32>
      %97 = arith.mulf %95, %96 : vector<3x128xf32>
      %98 = arith.addf %92, %97 : vector<3x128xf32>
      %99 = vector.extract_strided_slice %4 {offsets = [0, 1], sizes = [3, 1], strides = [1, 1]} : vector<3x9xf32> to vector<3x1xf32>
      %100 = vector.extract_strided_slice %90 {offsets = [1, 0], sizes = [1, 128], strides = [1, 1]} : vector<9x128xf32> to vector<1x128xf32>
      %101 = vector.broadcast %99 : vector<3x1xf32> to vector<3x128xf32>
      %102 = vector.broadcast %100 : vector<1x128xf32> to vector<3x128xf32>
      %103 = arith.mulf %101, %102 : vector<3x128xf32>
      %104 = arith.addf %98, %103 : vector<3x128xf32>
      %105 = vector.extract_strided_slice %4 {offsets = [0, 2], sizes = [3, 1], strides = [1, 1]} : vector<3x9xf32> to vector<3x1xf32>
      %106 = vector.extract_strided_slice %90 {offsets = [2, 0], sizes = [1, 128], strides = [1, 1]} : vector<9x128xf32> to vector<1x128xf32>
      %107 = vector.broadcast %105 : vector<3x1xf32> to vector<3x128xf32>
      %108 = vector.broadcast %106 : vector<1x128xf32> to vector<3x128xf32>
      %109 = arith.mulf %107, %108 : vector<3x128xf32>
      %110 = arith.addf %104, %109 : vector<3x128xf32>
      %111 = vector.extract_strided_slice %4 {offsets = [0, 3], sizes = [3, 1], strides = [1, 1]} : vector<3x9xf32> to vector<3x1xf32>
      %112 = vector.extract_strided_slice %90 {offsets = [3, 0], sizes = [1, 128], strides = [1, 1]} : vector<9x128xf32> to vector<1x128xf32>
      %113 = vector.broadcast %111 : vector<3x1xf32> to vector<3x128xf32>
      %114 = vector.broadcast %112 : vector<1x128xf32> to vector<3x128xf32>
      %115 = arith.mulf %113, %114 : vector<3x128xf32>
      %116 = arith.addf %110, %115 : vector<3x128xf32>
      %117 = vector.extract_strided_slice %4 {offsets = [0, 4], sizes = [3, 1], strides = [1, 1]} : vector<3x9xf32> to vector<3x1xf32>
      %118 = vector.extract_strided_slice %90 {offsets = [4, 0], sizes = [1, 128], strides = [1, 1]} : vector<9x128xf32> to vector<1x128xf32>
      %119 = vector.broadcast %117 : vector<3x1xf32> to vector<3x128xf32>
      %120 = vector.broadcast %118 : vector<1x128xf32> to vector<3x128xf32>
      %121 = arith.mulf %119, %120 : vector<3x128xf32>
      %122 = arith.addf %116, %121 : vector<3x128xf32>
      %123 = vector.extract_strided_slice %4 {offsets = [0, 5], sizes = [3, 1], strides = [1, 1]} : vector<3x9xf32> to vector<3x1xf32>
      %124 = vector.extract_strided_slice %90 {offsets = [5, 0], sizes = [1, 128], strides = [1, 1]} : vector<9x128xf32> to vector<1x128xf32>
      %125 = vector.broadcast %123 : vector<3x1xf32> to vector<3x128xf32>
      %126 = vector.broadcast %124 : vector<1x128xf32> to vector<3x128xf32>
      %127 = arith.mulf %125, %126 : vector<3x128xf32>
      %128 = arith.addf %122, %127 : vector<3x128xf32>
      %129 = vector.extract_strided_slice %4 {offsets = [0, 6], sizes = [3, 1], strides = [1, 1]} : vector<3x9xf32> to vector<3x1xf32>
      %130 = vector.extract_strided_slice %90 {offsets = [6, 0], sizes = [1, 128], strides = [1, 1]} : vector<9x128xf32> to vector<1x128xf32>
      %131 = vector.broadcast %129 : vector<3x1xf32> to vector<3x128xf32>
      %132 = vector.broadcast %130 : vector<1x128xf32> to vector<3x128xf32>
      %133 = arith.mulf %131, %132 : vector<3x128xf32>
      %134 = arith.addf %128, %133 : vector<3x128xf32>
      %135 = vector.extract_strided_slice %4 {offsets = [0, 7], sizes = [3, 1], strides = [1, 1]} : vector<3x9xf32> to vector<3x1xf32>
      %136 = vector.extract_strided_slice %90 {offsets = [7, 0], sizes = [1, 128], strides = [1, 1]} : vector<9x128xf32> to vector<1x128xf32>
      %137 = vector.broadcast %135 : vector<3x1xf32> to vector<3x128xf32>
      %138 = vector.broadcast %136 : vector<1x128xf32> to vector<3x128xf32>
      %139 = arith.mulf %137, %138 : vector<3x128xf32>
      %140 = arith.addf %134, %139 : vector<3x128xf32>
      %141 = vector.extract_strided_slice %4 {offsets = [0, 8], sizes = [3, 1], strides = [1, 1]} : vector<3x9xf32> to vector<3x1xf32>
      %142 = vector.extract_strided_slice %90 {offsets = [8, 0], sizes = [1, 128], strides = [1, 1]} : vector<9x128xf32> to vector<1x128xf32>
      %143 = vector.broadcast %141 : vector<3x1xf32> to vector<3x128xf32>
      %144 = vector.broadcast %142 : vector<1x128xf32> to vector<3x128xf32>
      %145 = arith.mulf %143, %144 : vector<3x128xf32>
      %146 = arith.addf %140, %145 : vector<3x128xf32>
      %c0_14 = arith.constant 0 : index
      %147 = arith.index_cast %8 : i32 to index
      %148 = vector.load %arg8[%c0_14, %147] : memref<3x256xf32, #tpu.memory_space<vmem>>, vector<3x128xf32>
      tpu.vector_store %arg8[%c0_14, %147], %146 {strides = array<i32>} : memref<3x256xf32, #tpu.memory_space<vmem>>, vector<3x128xf32>,
    }
    %c2_i32_11 = arith.constant 2 : i32
    return
  }
  func.func @transform_0(%arg0: i32) -> (i32, i32) {
    %c0_i32 = arith.constant 0 : i32
    %c0_i32_0 = arith.constant 0 : i32
    return %c0_i32, %arg0 : i32, i32
  }
  func.func @transform_1(%arg0: i32) -> (i32, i32) {
    %c0_i32 = arith.constant 0 : i32
    %c0_i32_0 = arith.constant 0 : i32
    %c0_i32_1 = arith.constant 0 : i32
    return %c0_i32, %c0_i32_0 : i32, i32
  }
  func.func @transform_2(%arg0: i32) -> (i32, i32) {
    %c0_i32 = arith.constant 0 : i32
    %c0_i32_0 = arith.constant 0 : i32
    %c0_i32_1 = arith.constant 0 : i32
    return %c0_i32, %c0_i32_0 : i32, i32
  }
  func.func @transform_3(%arg0: i32) -> (i32, i32) {
    %c0_i32 = arith.constant 0 : i32
    %c0_i32_0 = arith.constant 0 : i32
    %c0_i32_1 = arith.constant 0 : i32
    return %c0_i32, %c0_i32_0 : i32, i32
  }
  func.func @transform_4(%arg0: i32) -> (i32, i32) {
    %c0_i32 = arith.constant 0 : i32
    %c0_i32_0 = arith.constant 0 : i32
    %c0_i32_1 = arith.constant 0 : i32
    return %c0_i32, %c0_i32_0 : i32, i32
  }
  func.func @transform_5(%arg0: i32) -> (i32, i32) {
    %c0_i32 = arith.constant 0 : i32
    %c0_i32_0 = arith.constant 0 : i32
    %c0_i32_1 = arith.constant 0 : i32
    return %c0_i32, %c0_i32_0 : i32, i32
  }
  func.func @transform_6(%arg0: i32) -> (i32, i32) {
    %c0_i32 = arith.constant 0 : i32
    %c0_i32_0 = arith.constant 0 : i32
    %c0_i32_1 = arith.constant 0 : i32
    return %c0_i32, %c0_i32_0 : i32, i32
  }
  func.func @transform_7(%arg0: i32) -> (i32, i32) {
    %c0_i32 = arith.constant 0 : i32
    %c0_i32_0 = arith.constant 0 : i32
    return %c0_i32, %arg0 : i32, i32
  }
}

</mosaic_0001>

<llo_original>
// kernel: mlp_forward_t.1
$region0: #{mlp_forward_t.1}
  #allocation0 [shape = 'u32[]', space=smem, size = 0x4, offset = 0x4, fixed_abs, tag = 'smem constant byte address 0x4 - core index']
  #allocation1 [shape = 'u32[144,128]{1,0:T(1,128)}', space=vmem, size = 0x12000, scoped, tag = 'internal scratch']
  %s0 = inlined_call_operand.vmem [shape: f32[4,512], index: 0, kind: input, shape index: {}]
  %s1 = inlined_call_operand.vmem [shape: f32[8,4], index: 1, kind: input, shape index: {}]
  %s2 = inlined_call_operand.vmem [shape: f32[8,1], index: 2, kind: input, shape index: {}]
  %s3 = inlined_call_operand.vmem [shape: f32[9,8], index: 3, kind: input, shape index: {}]
  %s4 = inlined_call_operand.vmem [shape: f32[9,1], index: 4, kind: input, shape index: {}]
  %s5 = inlined_call_operand.vmem [shape: f32[3,9], index: 5, kind: input, shape index: {}]
  %s6 = inlined_call_operand.vmem [shape: f32[3,1], index: 6, kind: input, shape index: {}]
  %s7 = inlined_call_operand.vmem [shape: f32[3,512], index: 7, kind: output, shape index: {}]
  %s8 = sld [smem:[#allocation0]]
  $region68: #{mlp_forward_t.1} parent=0
    _
  %s10 = ssub.s32 1, %s8
  %s11 = scalar_select 0, %s10, %s8
  loop: start=0, step=1, limit=4
  $region2: #{mlp_forward_t.1} parent=0 // loop_pre_header
    _
  $region3: #{mlp_forward_t.1} parent=0 // loop_header
    %s13 = sphi 0, %s17
    %p14 = scmp.ge.s32.totalorder %s13, 4
    %s23 = sphi 0, %s25
    %s26 = sphi 0, %s23
    %s27 = sphi 0, %s26
    %s43 = sphi 0, %s27
    %s47 = sphi 0, %s47
    %s49 = sphi 0, %s47
    %s50 = sphi 0, %s49
    %s64 = sphi 0, %s50
    %s68 = sphi 0, %s68
    %s70 = sphi 0, %s68
    %s71 = sphi 0, %s70
    %s85 = sphi 0, %s71
    %s89 = sphi 0, %s89
    %s91 = sphi 0, %s89
    %s92 = sphi 0, %s91
    %s106 = sphi 0, %s92
    %s110 = sphi 0, %s110
    %s112 = sphi 0, %s110
    %s113 = sphi 0, %s112
    %s127 = sphi 0, %s113
    %s131 = sphi 0, %s131
    %s133 = sphi 0, %s131
    %s134 = sphi 0, %s133
    %s148 = sphi 0, %s134
    %s152 = sphi 0, %s152
    %s154 = sphi 0, %s152
    %s155 = sphi 0, %s154
    %s169 = sphi 0, %s155
    %s175 = sphi 0, %s177
    %s178 = sphi 0, %s175
    %s179 = sphi 0, %s178
    %s195 = sphi 0, %s179
  $region4: #{mlp_forward_t.1} parent=0 // loop_header_branch
    %16 = sbr.rel (%p14) target = $region8
  $region5: #{mlp_forward_t.1} parent=0 // loop_body
    %s18 = ssub.s32 %s13, 1
    %s19 = ssub.s32 %s13, 2
    %s20 = sadd.s32 %s13, 1
    %s21 = ssub.s32 %s13, %s20
    %p22 = scmp.eq.s32.totalorder %s21, 0
    %s24 = sadd.s32 %s23, 1
    %s25 = scalar_select %p22, %s23, %s24
    %p28 = pneg %p22
    %p29 = scmp.eq.s32.totalorder %s13, 1
    %p30 = por %p28, %p29
    %p31 = scmp.ne.s32.totalorder %s23, %s26
    %p32 = scmp.eq.s32.totalorder %s13, 0
    %p33 = por %p31, %p32
    %p34 = scmp.ne.s32.totalorder %s23, %s26
    %p35 = scmp.eq.s32.totalorder %s18, 1
    %p36 = por %p34, %p35
    %p37 = scmp.ne.s32.totalorder %s26, %s27
    %p38 = scmp.eq.s32.totalorder %s18, 0
    %p39 = por %p37, %p38
    %p40 = scmp.ne.s32.totalorder %s26, %s27
    %p41 = scmp.eq.s32.totalorder %s19, 1
    %p42 = por %p40, %p41
    %p44 = scmp.ne.s32.totalorder %s27, %s43
    %p45 = scmp.eq.s32.totalorder %s19, 0
    %p46 = por %p44, %p45
    %s48 = sadd.s32 %s47, 1
    %p51 = scmp.eq.s32.totalorder %s13, 1
    %p52 = scmp.ne.s32.totalorder %s47, %s49
    %p53 = scmp.eq.s32.totalorder %s13, 0
    %p54 = por %p52, %p53
    %p55 = scmp.ne.s32.totalorder %s47, %s49
    %p56 = scmp.eq.s32.totalorder %s18, 1
    %p57 = por %p55, %p56
    %p58 = scmp.ne.s32.totalorder %s49, %s50
    %p59 = scmp.eq.s32.totalorder %s18, 0
    %p60 = por %p58, %p59
    %p61 = scmp.ne.s32.totalorder %s49, %s50
    %p62 = scmp.eq.s32.totalorder %s19, 1
    %p63 = por %p61, %p62
    %p65 = scmp.ne.s32.totalorder %s50, %s64
    %p66 = scmp.eq.s32.totalorder %s19, 0
    %p67 = por %p65, %p66
    %s69 = sadd.s32 %s68, 1
    %p72 = scmp.eq.s32.totalorder %s13, 1
    %p73 = scmp.ne.s32.totalorder %s68, %s70
    %p74 = scmp.eq.s32.totalorder %s13, 0
    %p75 = por %p73, %p74
    %p76 = scmp.ne.s32.totalorder %s68, %s70
    %p77 = scmp.eq.s32.totalorder %s18, 1
    %p78 = por %p76, %p77
    %p79 = scmp.ne.s32.totalorder %s70, %s71
    %p80 = scmp.eq.s32.totalorder %s18, 0
    %p81 = por %p79, %p80
    %p82 = scmp.ne.s32.totalorder %s70, %s71
    %p83 = scmp.eq.s32.totalorder %s19, 1
    %p84 = por %p82, %p83
    %p86 = scmp.ne.s32.totalorder %s71, %s85
    %p87 = scmp.eq.s32.totalorder %s19, 0
    %p88 = por %p86, %p87
    %s90 = sadd.s32 %s89, 1
    %p93 = scmp.eq.s32.totalorder %s13, 1
    %p94 = scmp.ne.s32.totalorder %s89, %s91
    %p95 = scmp.eq.s32.totalorder %s13, 0
    %p96 = por %p94, %p95
    %p97 = scmp.ne.s32.totalorder %s89, %s91
    %p98 = scmp.eq.s32.totalorder %s18, 1
    %p99 = por %p97, %p98
    %p100 = scmp.ne.s32.totalorder %s91, %s92
    %p101 = scmp.eq.s32.totalorder %s18, 0
    %p102 = por %p100, %p101
    %p103 = scmp.ne.s32.totalorder %s91, %s92
    %p104 = scmp.eq.s32.totalorder %s19, 1
    %p105 = por %p103, %p104
    %p107 = scmp.ne.s32.totalorder %s92, %s106
    %p108 = scmp.eq.s32.totalorder %s19, 0
    %p109 = por %p107, %p108
    %s111 = sadd.s32 %s110, 1
    %p114 = scmp.eq.s32.totalorder %s13, 1
    %p115 = scmp.ne.s32.totalorder %s110, %s112
    %p116 = scmp.eq.s32.totalorder %s13, 0
    %p117 = por %p115, %p116
    %p118 = scmp.ne.s32.totalorder %s110, %s112
    %p119 = scmp.eq.s32.totalorder %s18, 1
    %p120 = por %p118, %p119
    %p121 = scmp.ne.s32.totalorder %s112, %s113
    %p122 = scmp.eq.s32.totalorder %s18, 0
    %p123 = por %p121, %p122
    %p124 = scmp.ne.s32.totalorder %s112, %s113
    %p125 = scmp.eq.s32.totalorder %s19, 1
    %p126 = por %p124, %p125
    %p128 = scmp.ne.s32.totalorder %s113, %s127
    %p129 = scmp.eq.s32.totalorder %s19, 0
    %p130 = por %p128, %p129
    %s132 = sadd.s32 %s131, 1
    %p135 = scmp.eq.s32.totalorder %s13, 1
    %p136 = scmp.ne.s32.totalorder %s131, %s133
    %p137 = scmp.eq.s32.totalorder %s13, 0
    %p138 = por %p136, %p137
    %p139 = scmp.ne.s32.totalorder %s131, %s133
    %p140 = scmp.eq.s32.totalorder %s18, 1
    %p141 = por %p139, %p140
    %p142 = scmp.ne.s32.totalorder %s133, %s134
    %p143 = scmp.eq.s32.totalorder %s18, 0
    %p144 = por %p142, %p143
    %p145 = scmp.ne.s32.totalorder %s133, %s134
    %p146 = scmp.eq.s32.totalorder %s19, 1
    %p147 = por %p145, %p146
    %p149 = scmp.ne.s32.totalorder %s134, %s148
    %p150 = scmp.eq.s32.totalorder %s19, 0
    %p151 = por %p149, %p150
    %s153 = sadd.s32 %s152, 1
    %p156 = scmp.eq.s32.totalorder %s13, 1
    %p157 = scmp.ne.s32.totalorder %s152, %s154
    %p158 = scmp.eq.s32.totalorder %s13, 0
    %p159 = por %p157, %p158
    %p160 = scmp.ne.s32.totalorder %s152, %s154
    %p161 = scmp.eq.s32.totalorder %s18, 1
    %p162 = por %p160, %p161
    %p163 = scmp.ne.s32.totalorder %s154, %s155
    %p164 = scmp.eq.s32.totalorder %s18, 0
    %p165 = por %p163, %p164
    %p166 = scmp.ne.s32.totalorder %s154, %s155
    %p167 = scmp.eq.s32.totalorder %s19, 1
    %p168 = por %p166, %p167
    %p170 = scmp.ne.s32.totalorder %s155, %s169
    %p171 = scmp.eq.s32.totalorder %s19, 0
    %p172 = por %p170, %p171
    %s173 = ssub.s32 %s13, %s20
    %p174 = scmp.eq.s32.totalorder %s173, 0
    %s176 = sadd.s32 %s175, 1
    %s177 = scalar_select %p174, %s175, %s176
    %p180 = pneg %p174
    %p181 = scmp.eq.s32.totalorder %s13, 1
    %p182 = por %p180, %p181
    %p183 = scmp.ne.s32.totalorder %s175, %s178
    %p184 = scmp.eq.s32.totalorder %s13, 0
    %p185 = por %p183, %p184
    %p186 = scmp.ne.s32.totalorder %s175, %s178
    %p187 = scmp.eq.s32.totalorder %s18, 1
    %p188 = por %p186, %p187
    %p189 = scmp.ne.s32.totalorder %s178, %s179
    %p190 = scmp.eq.s32.totalorder %s18, 0
    %p191 = por %p189, %p190
    %p192 = scmp.ne.s32.totalorder %s178, %s179
    %p193 = scmp.eq.s32.totalorder %s19, 1
    %p194 = por %p192, %p193
    %p196 = scmp.ne.s32.totalorder %s179, %s195
    %p197 = scmp.eq.s32.totalorder %s19, 0
    %p198 = por %p196, %p197
    %p199 = scmp.le.s32.totalorder 1, %s13
    %p200 = scmp.lt.s32.totalorder %s13, 3
    %p201 = pnand %p199, %p200
    %p202 = pneg %p201
    // Predicated region
    $region9: #{mlp_forward_t.1} parent=5 // pred_check
      _
    $region10: #{mlp_forward_t.1} parent=5 // pred_check_branch
      %204 = sbr.rel (%p201) target = $region12
    $region11: #{mlp_forward_t.1} parent=5 // pred_region
      %s205 = ssub.s32 %s13, 1
      // Predicated region
      $region13: #{mlp_forward_t.1} parent=11 // pred_check
        %p206 = pneg %p60
      $region14: #{mlp_forward_t.1} parent=11 // pred_check_branch
        %208 = sbr.rel (%p206) target = $region16
      $region15: #{mlp_forward_t.1} parent=11 // pred_region
        _
      $region16: #{mlp_forward_t.1} parent=11 // pred_fallthru
        _
      // Predicated region
      $region17: #{mlp_forward_t.1} parent=11 // pred_check
        %p209 = pneg %p81
      $region18: #{mlp_forward_t.1} parent=11 // pred_check_branch
        %211 = sbr.rel (%p209) target = $region20
      $region19: #{mlp_forward_t.1} parent=11 // pred_region
        _
      $region20: #{mlp_forward_t.1} parent=11 // pred_fallthru
        _
      // Predicated region
      $region21: #{mlp_forward_t.1} parent=11 // pred_check
        %p212 = pneg %p102
      $region22: #{mlp_forward_t.1} parent=11 // pred_check_branch
        %214 = sbr.rel (%p212) target = $region24
      $region23: #{mlp_forward_t.1} parent=11 // pred_region
        _
      $region24: #{mlp_forward_t.1} parent=11 // pred_fallthru
        _
      // Predicated region
      $region25: #{mlp_forward_t.1} parent=11 // pred_check
        %p215 = pneg %p123
      $region26: #{mlp_forward_t.1} parent=11 // pred_check_branch
        %217 = sbr.rel (%p215) target = $region28
      $region27: #{mlp_forward_t.1} parent=11 // pred_region
        _
      $region28: #{mlp_forward_t.1} parent=11 // pred_fallthru
        _
      // Predicated region
      $region29: #{mlp_forward_t.1} parent=11 // pred_check
        %p218 = pneg %p144
      $region30: #{mlp_forward_t.1} parent=11 // pred_check_branch
        %220 = sbr.rel (%p218) target = $region32
      $region31: #{mlp_forward_t.1} parent=11 // pred_region
        _
      $region32: #{mlp_forward_t.1} parent=11 // pred_fallthru
        _
      // Predicated region
      $region33: #{mlp_forward_t.1} parent=11 // pred_check
        %p221 = pneg %p165
      $region34: #{mlp_forward_t.1} parent=11 // pred_check_branch
        %223 = sbr.rel (%p221) target = $region36
      $region35: #{mlp_forward_t.1} parent=11 // pred_region
        _
      $region36: #{mlp_forward_t.1} parent=11 // pred_fallthru
        _
    $region12: #{mlp_forward_t.1} parent=5 // pred_fallthru
      _
    %p224 = scmp.lt.s32.totalorder %s13, 2
    // Predicated region
    $region37: #{mlp_forward_t.1} parent=5 // pred_check
      %p225 = pneg %p224
    $region38: #{mlp_forward_t.1} parent=5 // pred_check_branch
      %227 = sbr.rel (%p225) target = $region40
    $region39: #{mlp_forward_t.1} parent=5 // pred_region
      // Predicated region
      $region41: #{mlp_forward_t.1} parent=39 // pred_check
        %p228 = pneg %p33
      $region42: #{mlp_forward_t.1} parent=39 // pred_check_branch
        %230 = sbr.rel (%p228) target = $region44
      $region43: #{mlp_forward_t.1} parent=39 // pred_region
        %s231 = smul.u32 2, %s13
        %p232 = scmp.lt.s32.totalorder %s231, 3
        %s233 = scalar_select %p232, %s231, 3
        %s234 = smul.addr %s233, 4
        %s235 = scalar_lea.vmem %s0, %s234
        %s236 = smul.u32 2, %s13
      $region44: #{mlp_forward_t.1} parent=39 // pred_fallthru
        _
    $region40: #{mlp_forward_t.1} parent=5 // pred_fallthru
      _
    %p237 = scmp.le.s32.totalorder 1, %s13
    %p238 = scmp.lt.s32.totalorder %s13, 3
    %p239 = pnand %p237, %p238
    %p240 = pneg %p239
    // Predicated region
    $region45: #{mlp_forward_t.1} parent=5 // pred_check
      _
    $region46: #{mlp_forward_t.1} parent=5 // pred_check_branch
      %242 = sbr.rel (%p239) target = $region48
    $region47: #{mlp_forward_t.1} parent=5 // pred_region
      %s243 = ssub.s32 %s13, 1
      %s244 = smul.u32 2, %s18
      %p245 = scmp.lt.s32.totalorder %s244, 3
      %s246 = scalar_select %p245, %s244, 3
      %s247 = smul.addr %s246, 4
      %s248 = scalar_lea.vmem %s0, %s247
      %p249 = pneg %p39
      %p250 = pneg %p36
      %p251 = pneg %p60
      %p252 = pneg %p57
      %p253 = pneg %p81
      %p254 = pneg %p78
      %p255 = pneg %p102
      %p256 = pneg %p99
      %p257 = pneg %p123
      %p258 = pneg %p120
      %p259 = pneg %p144
      %p260 = pneg %p141
      %p261 = pneg %p165
      %p262 = pneg %p162
      %p263 = pneg %p191
      %p264 = pneg %p188
      %s265 = smul.u32 2, %s18
      %p266 = scmp.lt.s32.totalorder %s265, 3
      %s267 = scalar_select %p266, %s265, 3
      %s268 = smul.addr %s267, 4
      %s269 = scalar_lea.vmem %s7, %s268
      %s270 = smul.u32 2, %s18
      %p271 = scmp.lt.s32.totalorder %s270, 3
      %s272 = scalar_select %p271, %s270, 3
      %s273 = smul.addr %s272, 4
      %s274 = scalar_lea.vmem %s0, %s273
      %s275 = smul.u32 2, %s18
      %s276 = smul.u32 2, %s18
      %p277 = scmp.lt.s32.totalorder %s276, 3
      %s278 = scalar_select %p277, %s276, 3
      %s279 = smul.addr %s278, 4
      %s280 = scalar_lea.vmem %s7, %s279
      %s281 = smul.u32 2, %s18
      %v282 = vld [vmem:[%s1] sm:$0xff]
      %v283 = vld [vmem:[%s2] sm:$0xff]
      %v284 = vld [vmem:[%s3] sm:$0xff]
      %v285 = vld [vmem:[%s3 + $0x8] sm:$0x1]
      %v286 = vld [vmem:[%s4] sm:$0xff]
      %v287 = vld [vmem:[%s4 + $0x8] sm:$0x1]
      %v288 = vld [vmem:[%s5] sm:$0x7]
      %v289 = vld [vmem:[%s6] sm:$0x7]
      loop: start=0, step=1, limit=2
      $region49: #{mlp_forward_t.1} parent=47 // loop_pre_header
        _
      $region50: #{mlp_forward_t.1} parent=47 // loop_header
        %s291 = sphi 0, %s295
        %p292 = scmp.ge.s32.totalorder %s291, 2
      $region51: #{mlp_forward_t.1} parent=47 // loop_header_branch
        %294 = sbr.rel (%p292) target = $region55
      $region52: #{mlp_forward_t.1} parent=47 // loop_body
        %s296 = smul.u32 %s291, 128
        %s297 = sshra.s32 %s296, 7
        %s298 = sand.u32 %s296, 127
        %s299 = smul.addr %s297, 4
        %s300 = scalar_lea.vmem %s274, %s299
        %v301 = vld [vmem:[%s300] sm:$0xf]
        %303 = vset.pattern.permute.xlu0 0
        %304 = vperm.xlu0 %303, %v283
        %v305 = vpop.permute.xlu0 %304
        %308 = vset.pattern.permute.xlu0 0
        %309 = vperm.xlu0 %308, %v282
        %v310 = vpop.permute.xlu0 %309
        %v312 = vlaneseq
        %v313 = vshrl.u32 %v312, 7
        %v314 = vsub.s32 0, %v313
        %v315 = vrot.slane %v301, %v314
        %v316 = vmul.f32 %v310, %v315
        %v317 = vadd.f32 %v305, %v316
        %318 = vset.pattern.permute.xlu0 1
        %319 = vperm.xlu0 %318, %v282
        %v320 = vpop.permute.xlu0 %319
        %v322 = vlaneseq
        %v323 = vshrl.u32 %v322, 7
        %v324 = vsub.s32 1, %v323
        %v325 = vrot.slane %v301, %v324
        %v326 = vmul.f32 %v320, %v325
        %v327 = vadd.f32 %v317, %v326
        %328 = vset.pattern.permute.xlu0 2
        %329 = vperm.xlu0 %328, %v282
        %v330 = vpop.permute.xlu0 %329
        %v332 = vlaneseq
        %v333 = vshrl.u32 %v332, 7
        %v334 = vsub.s32 2, %v333
        %v335 = vrot.slane %v301, %v334
        %v336 = vmul.f32 %v330, %v335
        %v337 = vadd.f32 %v327, %v336
        %338 = vset.pattern.permute.xlu0 3
        %339 = vperm.xlu0 %338, %v282
        %v340 = vpop.permute.xlu0 %339
        %v342 = vlaneseq
        %v343 = vshrl.u32 %v342, 7
        %v344 = vsub.s32 3, %v343
        %v345 = vrot.slane %v301, %v344
        %v346 = vmul.f32 %v340, %v345
        %v347 = vadd.f32 %v337, %v346
        %v348 = vmax.f32 %v347, 0.0
        %350 = vset.pattern.permute.xlu0 0
        %351 = vperm.xlu0 %350, %v286
        %v352 = vpop.permute.xlu0 %351
        %355 = vset.pattern.permute.xlu0 0
        %356 = vperm.xlu0 %355, %v287
        %v357 = vpop.permute.xlu0 %356
        %360 = vset.pattern.permute.xlu0 0
        %361 = vperm.xlu0 %360, %v284
        %v362 = vpop.permute.xlu0 %361
        %365 = vset.pattern.permute.xlu0 0
        %366 = vperm.xlu0 %365, %v285
        %v367 = vpop.permute.xlu0 %366
        %v369 = vlaneseq
        %v370 = vshrl.u32 %v369, 7
        %v371 = vsub.s32 0, %v370
        %v372 = vrot.slane %v348, %v371
        %v373 = vmul.f32 %v362, %v372
        %v374 = vmul.f32 %v367, %v372
        %v375 = vadd.f32 %v352, %v373
        %v376 = vadd.f32 %v357, %v374
        %377 = vset.pattern.permute.xlu0 1
        %378 = vperm.xlu0 %377, %v284
        %v379 = vpop.permute.xlu0 %378
        %381 = vset.pattern.permute.xlu0 1
        %382 = vperm.xlu0 %381, %v285
        %v383 = vpop.permute.xlu0 %382
        %v385 = vlaneseq
        %v386 = vshrl.u32 %v385, 7
        %v387 = vsub.s32 1, %v386
        %v388 = vrot.slane %v348, %v387
        %v389 = vmul.f32 %v379, %v388
        %v390 = vmul.f32 %v383, %v388
        %v391 = vadd.f32 %v375, %v389
        %v392 = vadd.f32 %v376, %v390
        %393 = vset.pattern.permute.xlu0 2
        %394 = vperm.xlu0 %393, %v284
        %v395 = vpop.permute.xlu0 %394
        %397 = vset.pattern.permute.xlu0 2
        %398 = vperm.xlu0 %397, %v285
        %v399 = vpop.permute.xlu0 %398
        %v401 = vlaneseq
        %v402 = vshrl.u32 %v401, 7
        %v403 = vsub.s32 2, %v402
        %v404 = vrot.slane %v348, %v403
        %v405 = vmul.f32 %v395, %v404
        %v406 = vmul.f32 %v399, %v404
        %v407 = vadd.f32 %v391, %v405
        %v408 = vadd.f32 %v392, %v406
        %409 = vset.pattern.permute.xlu0 3
        %410 = vperm.xlu0 %409, %v284
        %v411 = vpop.permute.xlu0 %410
        %413 = vset.pattern.permute.xlu0 3
        %414 = vperm.xlu0 %413, %v285
        %v415 = vpop.permute.xlu0 %414
        %v417 = vlaneseq
        %v418 = vshrl.u32 %v417, 7
        %v419 = vsub.s32 3, %v418
        %v420 = vrot.slane %v348, %v419
        %v421 = vmul.f32 %v411, %v420
        %v422 = vmul.f32 %v415, %v420
        %v423 = vadd.f32 %v407, %v421
        %v424 = vadd.f32 %v408, %v422
        %425 = vset.pattern.permute.xlu0 4
        %426 = vperm.xlu0 %425, %v284
        %v427 = vpop.permute.xlu0 %426
        %429 = vset.pattern.permute.xlu0 4
        %430 = vperm.xlu0 %429, %v285
        %v431 = vpop.permute.xlu0 %430
        %v433 = vlaneseq
        %v434 = vshrl.u32 %v433, 7
        %v435 = vsub.s32 4, %v434
        %v436 = vrot.slane %v348, %v435
        %v437 = vmul.f32 %v427, %v436
        %v438 = vmul.f32 %v431, %v436
        %v439 = vadd.f32 %v423, %v437
        %v440 = vadd.f32 %v424, %v438
        %441 = vset.pattern.permute.xlu0 5
        %442 = vperm.xlu0 %441, %v284
        %v443 = vpop.permute.xlu0 %442
        %445 = vset.pattern.permute.xlu0 5
        %446 = vperm.xlu0 %445, %v285
        %v447 = vpop.permute.xlu0 %446
        %v449 = vlaneseq
        %v450 = vshrl.u32 %v449, 7
        %v451 = vsub.s32 5, %v450
        %v452 = vrot.slane %v348, %v451
        %v453 = vmul.f32 %v443, %v452
        %v454 = vmul.f32 %v447, %v452
        %v455 = vadd.f32 %v439, %v453
        %v456 = vadd.f32 %v440, %v454
        %457 = vset.pattern.permute.xlu0 6
        %458 = vperm.xlu0 %457, %v284
        %v459 = vpop.permute.xlu0 %458
        %461 = vset.pattern.permute.xlu0 6
        %462 = vperm.xlu0 %461, %v285
        %v463 = vpop.permute.xlu0 %462
        %v465 = vlaneseq
        %v466 = vshrl.u32 %v465, 7
        %v467 = vsub.s32 6, %v466
        %v468 = vrot.slane %v348, %v467
        %v469 = vmul.f32 %v459, %v468
        %v470 = vmul.f32 %v463, %v468
        %v471 = vadd.f32 %v455, %v469
        %v472 = vadd.f32 %v456, %v470
        %473 = vset.pattern.permute.xlu0 7
        %474 = vperm.xlu0 %473, %v284
        %v475 = vpop.permute.xlu0 %474
        %477 = vset.pattern.permute.xlu0 7
        %478 = vperm.xlu0 %477, %v285
        %v479 = vpop.permute.xlu0 %478
        %v481 = vlaneseq
        %v482 = vshrl.u32 %v481, 7
        %v483 = vsub.s32 7, %v482
        %v484 = vrot.slane %v348, %v483
        %v485 = vmul.f32 %v475, %v484
        %v486 = vmul.f32 %v479, %v484
        %v487 = vadd.f32 %v471, %v485
        %v488 = vadd.f32 %v472, %v486
        %v489 = vmax.f32 %v487, 0.0
        %v490 = vmax.f32 %v488, 0.0
        %492 = vset.pattern.permute.xlu0 0
        %493 = vperm.xlu0 %492, %v289
        %v494 = vpop.permute.xlu0 %493
        %497 = vset.pattern.permute.xlu0 0
        %498 = vperm.xlu0 %497, %v288
        %v499 = vpop.permute.xlu0 %498
        %v501 = vlaneseq
        %v502 = vshrl.u32 %v501, 7
        %v503 = vsub.s32 0, %v502
        %v504 = vrot.slane %v489, %v503
        %v505 = vmul.f32 %v499, %v504
        %v506 = vadd.f32 %v494, %v505
        %507 = vset.pattern.permute.xlu0 1
        %508 = vperm.xlu0 %507, %v288
        %v509 = vpop.permute.xlu0 %508
        %v511 = vlaneseq
        %v512 = vshrl.u32 %v511, 7
        %v513 = vsub.s32 1, %v512
        %v514 = vrot.slane %v489, %v513
        %v515 = vmul.f32 %v509, %v514
        %v516 = vadd.f32 %v506, %v515
        %517 = vset.pattern.permute.xlu0 2
        %518 = vperm.xlu0 %517, %v288
        %v519 = vpop.permute.xlu0 %518
        %v521 = vlaneseq
        %v522 = vshrl.u32 %v521, 7
        %v523 = vsub.s32 2, %v522
        %v524 = vrot.slane %v489, %v523
        %v525 = vmul.f32 %v519, %v524
        %v526 = vadd.f32 %v516, %v525
        %527 = vset.pattern.permute.xlu0 3
        %528 = vperm.xlu0 %527, %v288
        %v529 = vpop.permute.xlu0 %528
        %v531 = vlaneseq
        %v532 = vshrl.u32 %v531, 7
        %v533 = vsub.s32 3, %v532
        %v534 = vrot.slane %v489, %v533
        %v535 = vmul.f32 %v529, %v534
        %v536 = vadd.f32 %v526, %v535
        %537 = vset.pattern.permute.xlu0 4
        %538 = vperm.xlu0 %537, %v288
        %v539 = vpop.permute.xlu0 %538
        %v541 = vlaneseq
        %v542 = vshrl.u32 %v541, 7
        %v543 = vsub.s32 4, %v542
        %v544 = vrot.slane %v489, %v543
        %v545 = vmul.f32 %v539, %v544
        %v546 = vadd.f32 %v536, %v545
        %547 = vset.pattern.permute.xlu0 5
        %548 = vperm.xlu0 %547, %v288
        %v549 = vpop.permute.xlu0 %548
        %v551 = vlaneseq
        %v552 = vshrl.u32 %v551, 7
        %v553 = vsub.s32 5, %v552
        %v554 = vrot.slane %v489, %v553
        %v555 = vmul.f32 %v549, %v554
        %v556 = vadd.f32 %v546, %v555
        %557 = vset.pattern.permute.xlu0 6
        %558 = vperm.xlu0 %557, %v288
        %v559 = vpop.permute.xlu0 %558
        %v561 = vlaneseq
        %v562 = vshrl.u32 %v561, 7
        %v563 = vsub.s32 6, %v562
        %v564 = vrot.slane %v489, %v563
        %v565 = vmul.f32 %v559, %v564
        %v566 = vadd.f32 %v556, %v565
        %567 = vset.pattern.permute.xlu0 7
        %568 = vperm.xlu0 %567, %v288
        %v569 = vpop.permute.xlu0 %568
        %v571 = vlaneseq
        %v572 = vshrl.u32 %v571, 7
        %v573 = vsub.s32 7, %v572
        %v574 = vrot.slane %v489, %v573
        %v575 = vmul.f32 %v569, %v574
        %v576 = vadd.f32 %v566, %v575
        %577 = vset.pattern.permute.xlu0 8
        %578 = vperm.xlu0 %577, %v288
        %v579 = vpop.permute.xlu0 %578
        %v581 = vlaneseq
        %v582 = vshrl.u32 %v581, 7
        %v583 = vsub.s32 0, %v582
        %v584 = vrot.slane %v490, %v583
        %v585 = vmul.f32 %v579, %v584
        %v586 = vadd.f32 %v576, %v585
        %s587 = smul.addr %s297, 4
        %s588 = scalar_lea.vmem %s280, %s587
        %589 = vst [vmem:[%s588] sm:$0x7] %v586
      $region53: #{mlp_forward_t.1} parent=47 // loop_footer
        %s295 = sadd.s32 1, %s291
      $region54: #{mlp_forward_t.1} parent=47 // loop_footer_branch
        %290 = sbr.rel target = $region50
      $region55: #{mlp_forward_t.1} parent=47 // loop_exit
        _
      %s590 = smul.u32 2, %s18
      %p591 = scmp.lt.s32.totalorder %s590, 3
      %s592 = scalar_select %p591, %s590, 3
      %s593 = smul.addr %s592, 4
      %s594 = scalar_lea.vmem %s7, %s593
      // Predicated region
      $region56: #{mlp_forward_t.1} parent=47 // pred_check
        %p595 = pneg %p188
      $region57: #{mlp_forward_t.1} parent=47 // pred_check_branch
        %597 = sbr.rel (%p595) target = $region59
      $region58: #{mlp_forward_t.1} parent=47 // pred_region
        %s598 = smul.u32 2, %s18
      $region59: #{mlp_forward_t.1} parent=47 // pred_fallthru
        _
    $region48: #{mlp_forward_t.1} parent=5 // pred_fallthru
      _
    %p599 = scmp.le.s32.totalorder 2, %s13
    // Predicated region
    $region60: #{mlp_forward_t.1} parent=5 // pred_check
      %p600 = pneg %p599
    $region61: #{mlp_forward_t.1} parent=5 // pred_check_branch
      %602 = sbr.rel (%p600) target = $region63
    $region62: #{mlp_forward_t.1} parent=5 // pred_region
      %s603 = ssub.s32 %s13, 2
      // Predicated region
      $region64: #{mlp_forward_t.1} parent=62 // pred_check
        %p604 = pneg %p194
      $region65: #{mlp_forward_t.1} parent=62 // pred_check_branch
        %606 = sbr.rel (%p604) target = $region67
      $region66: #{mlp_forward_t.1} parent=62 // pred_region
        %s607 = smul.u32 2, %s19
        %p608 = scmp.lt.s32.totalorder %s607, 3
        %s609 = scalar_select %p608, %s607, 3
        %s610 = smul.addr %s609, 4
        %s611 = scalar_lea.vmem %s7, %s610
      $region67: #{mlp_forward_t.1} parent=62 // pred_fallthru
        _
    $region63: #{mlp_forward_t.1} parent=5 // pred_fallthru
      _
  $region6: #{mlp_forward_t.1} parent=0 // loop_footer
    %s17 = sadd.s32 1, %s13
  $region7: #{mlp_forward_t.1} parent=0 // loop_footer_branch
    %12 = sbr.rel target = $region3
  $region8: #{mlp_forward_t.1} parent=0 // loop_exit
    _

</llo_original>
